<compile_context>
chip_gen: v7x
topology: tpu7x:2x2x1
jax: 0.10.0
libtpu: 0.0.40
codegen_flags: <defaults>
</compile_context>

<pallas_src>
import jax
import jax.numpy as jnp
from jax.experimental import pallas as pl
from jax.experimental.pallas import tpu as pltpu


# Normalization constants from the module (osnet_x0_25 feature dim is 512).
PIXEL_MEAN = (0.485, 0.456, 0.406)
PIXEL_STD = (0.229, 0.224, 0.225)


def _round_up(x, m):
    return ((x + m - 1) // m) * m


def reid_kernel(x_ref, w1_ref, b1_ref, w2_ref, b2_ref, o_ref, acc_ref):
    """Streamed first layer (K-reduction over pixel blocks) + fused epilogue.

    Preprocessing (/255 + Normalize) is folded into w1/b1 offline, so x_ref
    holds raw uint8 pixels.  acc_ref is an f32 VMEM accumulator resident
    across the K grid axis; the ReLU + second matmul run only on the last
    K step.
    """
    k = pl.program_id(1)

    @pl.when(k == 0)
    def _init():
        acc_ref[...] = jnp.zeros_like(acc_ref)

    # uint8 -> f32 -> bf16 (0..255 is exact in bf16; no i32 hop -> one fewer
    # VPU pass per element and no 4x vreg expansion of the u8 tile).
    x = x_ref[...].astype(jnp.float32).astype(jnp.bfloat16)
    acc_ref[...] += jnp.dot(x, w1_ref[...], preferred_element_type=jnp.float32)

    @pl.when(k == pl.num_programs(1) - 1)
    def _epilogue():
        h = jnp.maximum(acc_ref[...] + b1_ref[...], 0.0)
        feats = jnp.dot(h.astype(jnp.bfloat16), w2_ref[...],
                        preferred_element_type=jnp.float32) + b2_ref[...]
        o_ref[...] = feats.astype(o_ref.dtype)


def init_params(key, h, w, c, hidden, feat_dim):
    """Deterministic synthetic backbone weights (no checkpoint load)."""
    d = h * w * c
    k1, k2 = jax.random.split(key)
    w1 = jax.random.normal(k1, (d, hidden), jnp.float32) * (1.0 / jnp.sqrt(d))
    b1 = jnp.zeros((hidden,), jnp.float32)
    w2 = jax.random.normal(k2, (hidden, feat_dim), jnp.float32) * (1.0 / jnp.sqrt(hidden))
    b2 = jnp.zeros((feat_dim,), jnp.float32)
    # Per-channel mean/std tiled to the flattened NHWC (channel-fastest) layout.
    mean_flat = jnp.tile(jnp.asarray(PIXEL_MEAN, jnp.float32), (h * w,))  # (D,)
    std_flat = jnp.tile(jnp.asarray(PIXEL_STD, jnp.float32), (h * w,))    # (D,)
    return {"w1": w1, "b1": b1, "w2": w2, "b2": b2,
            "mean_flat": mean_flat, "std_flat": std_flat}


def fold_preprocess(params):
    """Fold ToTensor(/255) + Normalize(mean,std) into layer-1; cast to bf16.

    (u8/255 - mean)/std @ w1 + b1
        == u8 @ (w1 / (255*std)[:,None]) + (b1 - (mean/std) @ w1)
    """
    w1, b1 = params["w1"], params["b1"]
    mean_flat, std_flat = params["mean_flat"], params["std_flat"]
    scale = 1.0 / (255.0 * std_flat)                               # (D,)
    w1_f = (w1 * scale[:, None]).astype(jnp.bfloat16)              # (D, hidden)
    b1_f = (b1 - (mean_flat / std_flat) @ w1).astype(jnp.float32)  # (hidden,)
    return {
        "w1": w1_f,
        "b1": b1_f.reshape(1, -1),
        "w2": params["w2"].astype(jnp.bfloat16),
        "b2": params["b2"].reshape(1, -1).astype(jnp.float32),
    }


def reid_forward(im_batch_u8, folded, *, tm=None, tk=None,
                 vmem_limit_bytes=48 * 1024 * 1024):
    """Mirror of ReIDDetectMultiBackend.forward for the .pt path (fp16=False).

    im_batch_u8: (N, H, W, C) uint8 images, assumed already at image_size.
    Returns (N, FEAT) float32 features.

    Tile selection (perf review):
      * tm: multiple of 32 (u8 native (32,128) tiling / MXU row occupancy),
        capped at 256, whole padded batch when the batch is small. On v7x,
        pass tm explicitly so n_tiles is even (>= 2) to shard across both TCs.
      * tk: multiple of 128, capped at 2048 so grid-step overhead amortizes
        and each vmatmul sees a deep K; VMEM cost of a (tk, HIDDEN) bf16 w1
        block stays well inside the 48 MiB budget (v7x-safe; raise the limit
        to ~100 MiB on v5e/v6e for even larger tiles).
    """
    n, h, w, c = im_batch_u8.shape
    d = h * w * c
    w1, b1, w2, b2 = folded["w1"], folded["b1"], folded["w2"], folded["b2"]
    assert w1.shape[0] == d, "weights do not match image size"
    hidden = w1.shape[1]
    feat = w2.shape[1]

    if tm is None:
        tm = min(256, _round_up(n, 32))
    if tk is None:
        tk = min(2048, _round_up(d, 128))

    # Flatten NHWC -> (N, D) channel-fastest (matches mean/std tiling above).
    x = im_batch_u8.reshape(n, d)

    # Pad batch to a multiple of tm and D to a multiple of tk (zero pixels x
    # zero-padded w1 rows contribute nothing; padded rows sliced off at end).
    n_pad = _round_up(n, tm)
    d_pad = _round_up(d, tk)
    if n_pad != n or d_pad != d:
        x = jnp.pad(x, ((0, n_pad - n), (0, d_pad - d)))
    if d_pad != d:
        w1 = jnp.pad(w1, ((0, d_pad - d), (0, 0)))

    n_tiles = n_pad // tm
    k_tiles = d_pad // tk

    cost = pl.CostEstimate(
        flops=2 * n_pad * d_pad * hidden + 2 * n_pad * hidden * feat,
        transcendentals=0,
        # w1 is re-streamed from HBM once per batch tile.
        bytes_accessed=int(x.size * x.dtype.itemsize
                           + n_tiles * w1.size * 2
                           + w2.size * 2
                           + b1.size * 4 + b2.size * 4
                           + n_pad * feat * 4),
    )

    out = pl.pallas_call(
        reid_kernel,
        out_shape=jax.ShapeDtypeStruct((n_pad, feat), jnp.float32),
        grid_spec=pltpu.PrefetchScalarGridSpec(
            num_scalar_prefetch=0,
            grid=(n_tiles, k_tiles),
            in_specs=[
                # uint8 pixels (streamed over batch x K)
                pl.BlockSpec((tm, tk), lambda i, k: (i, k)),
                # folded w1 (bf16), streamed over K, double-buffered
                pl.BlockSpec((tk, hidden), lambda i, k: (k, 0)),
                # constant-index residents: single-buffered to save VMEM
                pl.BlockSpec((1, hidden), lambda i, k: (0, 0),
                             pipeline_mode=pl.Buffered(1)),
                pl.BlockSpec((hidden, feat), lambda i, k: (0, 0),
                             pipeline_mode=pl.Buffered(1)),
                pl.BlockSpec((1, feat), lambda i, k: (0, 0),
                             pipeline_mode=pl.Buffered(1)),
            ],
            out_specs=pl.BlockSpec((tm, feat), lambda i, k: (i, 0)),  # resident over K
            scratch_shapes=[pltpu.VMEM((tm, hidden), jnp.float32)],
        ),
        compiler_params=pltpu.CompilerParams(
            dimension_semantics=("parallel", "arbitrary"),
            vmem_limit_bytes=vmem_limit_bytes,
        ),
        cost_estimate=cost,
    )(x, w1, b1, w2, b2)
    return out[:n]


def reid_reference(im_batch_u8, params):
    """Pure-JAX unfused reference: /255 -> Normalize -> FC -> ReLU -> FC."""
    n, h, w, c = im_batch_u8.shape
    d = h * w * c
    x = im_batch_u8.reshape(n, d).astype(jnp.float32) / 255.0
    xn = (x - params["mean_flat"][None, :]) / params["std_flat"][None, :]
    hh = jnp.maximum(jnp.dot(xn, params["w1"], preferred_element_type=jnp.float32)
                     + params["b1"][None, :], 0.0)
    return (jnp.dot(hh, params["w2"], preferred_element_type=jnp.float32)
            + params["b2"][None, :])


if __name__ == "__main__":
    key = jax.random.PRNGKey(0)
    k_img, k_param = jax.random.split(key)

    # Small shapes keeping the module's (256,128) 2:1 aspect ratio.
    N, H, W, C = 2, 16, 8, 3
    HIDDEN, FEAT = 128, 512   # hidden padded to a full lane width; ReID feat dim 512

    im_batch = jax.random.randint(k_img, (N, H, W, C), 0, 256,
                                  dtype=jnp.int32).astype(jnp.uint8)
    params = init_params(k_param, H, W, C, HIDDEN, FEAT)
    folded = fold_preprocess(params)

    feats = reid_forward(im_batch, folded)   # tm/tk auto-sized (32 / 384 here)
    feats = jax.block_until_ready(feats)

    assert feats.shape == (N, FEAT)
    assert feats.dtype == jnp.float32
    assert bool(jnp.all(jnp.isfinite(feats)))

    # Verify the folded bf16 kernel against the unfused f32 reference.
    ref = reid_reference(im_batch, params)
    max_err = float(jnp.max(jnp.abs(feats - ref)))
    ref_scale = float(jnp.max(jnp.abs(ref))) + 1e-6
    assert max_err <= 5e-2 * ref_scale + 1e-3, \
        f"mismatch: max abs err {max_err} vs ref scale {ref_scale}"

    print("KERNEL_OK")
</pallas_src>

<mosaic_0001>
module attributes {stable_mosaic.version = 11 : i64} {
  func.func @reid_kernel(%arg0: i32, %arg1: i32, %arg2: memref<32x384xi8, #tpu.memory_space<vmem>>, %arg3: memref<384x128xbf16, #tpu.memory_space<vmem>>, %arg4: memref<1x128xf32, #tpu.memory_space<vmem>>, %arg5: memref<128x512xbf16, #tpu.memory_space<vmem>>, %arg6: memref<1x512xf32, #tpu.memory_space<vmem>>, %arg7: memref<32x512xf32, #tpu.memory_space<vmem>>, %arg8: memref<32x128xf32, #tpu.memory_space<vmem>>) attributes {dimension_semantics = [#tpu.dimension_semantics<parallel>, #tpu.dimension_semantics<arbitrary>], iteration_bounds = array<i64: 1, 1>, scalar_prefetch = 0 : i64, scratch_operands = 1 : i64, tpu.core_type = #tpu.core_type<tc>, window_params = [{transform_indices = @transform_0, window_bounds = array<i64: 32, 384>}, {transform_indices = @transform_1, window_bounds = array<i64: 384, 128>}, {pipeline_mode = #tpu.pipeline_mode<synchronous>, transform_indices = @transform_2, window_bounds = array<i64: 1, 128>}, {pipeline_mode = #tpu.pipeline_mode<synchronous>, transform_indices = @transform_3, window_bounds = array<i64: 128, 512>}, {pipeline_mode = #tpu.pipeline_mode<synchronous>, transform_indices = @transform_4, window_bounds = array<i64: 1, 512>}, {transform_indices = @transform_5, window_bounds = array<i64: 32, 512>}]} {
    %c0_i32 = arith.constant 0 : i32
    %0 = arith.cmpi eq, %arg1, %c0_i32 : i32
    %1 = arith.extui %0 : i1 to i32
    %c0_i32_0 = arith.constant 0 : i32
    %2 = arith.cmpi ne, %1, %c0_i32_0 : i32
    scf.if %2 {
      %cst_10 = arith.constant 0.000000e+00 : f32
      %14 = vector.broadcast %cst_10 : f32 to vector<32x128xf32>
      %c0_11 = arith.constant 0 : index
      %c0_12 = arith.constant 0 : index
      %15 = vector.load %arg8[%c0_11, %c0_12] : memref<32x128xf32, #tpu.memory_space<vmem>>, vector<32x128xf32>
      tpu.vector_store %arg8[%c0_11, %c0_12], %14 {strides = array<i32>} : memref<32x128xf32, #tpu.memory_space<vmem>>, vector<32x128xf32>,
    } else {
    }
    %c0 = arith.constant 0 : index
    %c0_1 = arith.constant 0 : index
    %3 = vector.load %arg2[%c0, %c0_1] : memref<32x384xi8, #tpu.memory_space<vmem>>, vector<32x384xi8>
    %4 = arith.uitofp %3 : vector<32x384xi8> to vector<32x384xf32>
    %5 = arith.truncf %4 : vector<32x384xf32> to vector<32x384xbf16>
    %c0_2 = arith.constant 0 : index
    %c0_3 = arith.constant 0 : index
    %6 = vector.load %arg8[%c0_2, %c0_3] : memref<32x128xf32, #tpu.memory_space<vmem>>, vector<32x128xf32>
    %c0_4 = arith.constant 0 : index
    %c0_5 = arith.constant 0 : index
    %7 = vector.load %arg3[%c0_4, %c0_5] : memref<384x128xbf16, #tpu.memory_space<vmem>>, vector<384x128xbf16>
    %cst = arith.constant dense<0.000000e+00> : vector<32x128xf32>
    %8 = tpu.matmul %5, %7, %cst {dimension_numbers = #tpu.dot_dimension_numbers<[1], [0], [0], [1], [0, 0, 1, 1], [], []>} : vector<32x384xbf16>, vector<384x128xbf16>, vector<32x128xf32> -> vector<32x128xf32>
    %9 = arith.addf %6, %8 : vector<32x128xf32>
    %c0_6 = arith.constant 0 : index
    %c0_7 = arith.constant 0 : index
    %10 = vector.load %arg8[%c0_6, %c0_7] : memref<32x128xf32, #tpu.memory_space<vmem>>, vector<32x128xf32>
    tpu.vector_store %arg8[%c0_6, %c0_7], %9 {strides = array<i32>} : memref<32x128xf32, #tpu.memory_space<vmem>>, vector<32x128xf32>,
    %c0_i32_8 = arith.constant 0 : i32
    %11 = arith.cmpi eq, %arg1, %c0_i32_8 : i32
    %12 = arith.extui %11 : i1 to i32
    %c0_i32_9 = arith.constant 0 : i32
    %13 = arith.cmpi ne, %12, %c0_i32_9 : i32
    scf.if %13 {
      %c0_10 = arith.constant 0 : index
      %c0_11 = arith.constant 0 : index
      %14 = vector.load %arg8[%c0_10, %c0_11] : memref<32x128xf32, #tpu.memory_space<vmem>>, vector<32x128xf32>
      %c0_12 = arith.constant 0 : index
      %c0_13 = arith.constant 0 : index
      %15 = vector.load %arg4[%c0_12, %c0_13] : memref<1x128xf32, #tpu.memory_space<vmem>>, vector<1x128xf32>
      %16 = vector.broadcast %15 : vector<1x128xf32> to vector<32x128xf32>
      %17 = arith.addf %14, %16 : vector<32x128xf32>
      %cst_14 = arith.constant 0.000000e+00 : f32
      %18 = vector.broadcast %cst_14 : f32 to vector<32x128xf32>
      %19 = arith.maximumf %17, %18 : vector<32x128xf32>
      %20 = arith.truncf %19 : vector<32x128xf32> to vector<32x128xbf16>
      %c0_15 = arith.constant 0 : index
      %c0_16 = arith.constant 0 : index
      %21 = vector.load %arg5[%c0_15, %c0_16] : memref<128x512xbf16, #tpu.memory_space<vmem>>, vector<128x512xbf16>
      %cst_17 = arith.constant dense<0.000000e+00> : vector<32x512xf32>
      %22 = tpu.matmul %20, %21, %cst_17 {dimension_numbers = #tpu.dot_dimension_numbers<[1], [0], [0], [1], [0, 0, 1, 1], [], []>} : vector<32x128xbf16>, vector<128x512xbf16>, vector<32x512xf32> -> vector<32x512xf32>
      %c0_18 = arith.constant 0 : index
      %c0_19 = arith.constant 0 : index
      %23 = vector.load %arg6[%c0_18, %c0_19] : memref<1x512xf32, #tpu.memory_space<vmem>>, vector<1x512xf32>
      %24 = vector.broadcast %23 : vector<1x512xf32> to vector<32x512xf32>
      %25 = arith.addf %22, %24 : vector<32x512xf32>
      %c0_20 = arith.constant 0 : index
      %c0_21 = arith.constant 0 : index
      %26 = vector.load %arg7[%c0_20, %c0_21] : memref<32x512xf32, #tpu.memory_space<vmem>>, vector<32x512xf32>
      tpu.vector_store %arg7[%c0_20, %c0_21], %25 {strides = array<i32>} : memref<32x512xf32, #tpu.memory_space<vmem>>, vector<32x512xf32>,
    } else {
    }
    return
  }
  func.func @transform_0(%arg0: i32, %arg1: i32) -> (i32, i32) {
    %c0_i32 = arith.constant 0 : i32
    return %arg0, %arg1 : i32, i32
  }
  func.func @transform_1(%arg0: i32, %arg1: i32) -> (i32, i32) {
    %c0_i32 = arith.constant 0 : i32
    %c0_i32_0 = arith.constant 0 : i32
    return %arg1, %c0_i32 : i32, i32
  }
  func.func @transform_2(%arg0: i32, %arg1: i32) -> (i32, i32) {
    %c0_i32 = arith.constant 0 : i32
    %c0_i32_0 = arith.constant 0 : i32
    %c0_i32_1 = arith.constant 0 : i32
    return %c0_i32, %c0_i32_0 : i32, i32
  }
  func.func @transform_3(%arg0: i32, %arg1: i32) -> (i32, i32) {
    %c0_i32 = arith.constant 0 : i32
    %c0_i32_0 = arith.constant 0 : i32
    %c0_i32_1 = arith.constant 0 : i32
    return %c0_i32, %c0_i32_0 : i32, i32
  }
  func.func @transform_4(%arg0: i32, %arg1: i32) -> (i32, i32) {
    %c0_i32 = arith.constant 0 : i32
    %c0_i32_0 = arith.constant 0 : i32
    %c0_i32_1 = arith.constant 0 : i32
    return %c0_i32, %c0_i32_0 : i32, i32
  }
  func.func @transform_5(%arg0: i32, %arg1: i32) -> (i32, i32) {
    %c0_i32 = arith.constant 0 : i32
    %c0_i32_0 = arith.constant 0 : i32
    return %arg0, %c0_i32 : i32, i32
  }
}

</mosaic_0001>

<llo_original>
// kernel: tpu_custom_call.1
$region0: #{tpu_custom_call.1}
  #allocation0 [shape = 'u32[]', space=smem, size = 0x4, offset = 0x4, fixed_abs, tag = 'smem constant byte address 0x4 - core index']
  #allocation1 [shape = 'u32[144,128]{1,0:T(1,128)}', space=vmem, size = 0x12000, scoped, tag = 'internal scratch']
  #allocation2 [shape = 'f32[32,128]{1,0:T(8,128)}', space=vmem, size = 0x4000, scoped, tag = 'scratch operand']
  %s0 = inlined_call_operand.hbm [shape: u8[32,384], index: 0, kind: input, shape index: {}]
  %s1 = inlined_call_operand.hbm [shape: bf16[384,128], index: 1, kind: input, shape index: {}]
  %s2 = inlined_call_operand.vmem [shape: f32[1,128], index: 2, kind: input, shape index: {}]
  %s3 = inlined_call_operand.hbm [shape: bf16[128,512], index: 3, kind: input, shape index: {}]
  %s4 = inlined_call_operand.vmem [shape: f32[1,512], index: 4, kind: input, shape index: {}]
  %s5 = inlined_call_operand.hbm [shape: f32[32,512], index: 5, kind: output, shape index: {}]
  %s6 = sld [smem:[#allocation0]]
  $region50: #{tpu_custom_call.1} parent=0
    _
  %s8 = ssub.s32 1, %s6
  %s9 = scalar_select 0, %s8, %s6
  $region1: #{tpu_custom_call.1} parent=0
    #allocation3 [shape = 'u8[12288]{0}', space=vmem, size = 0x3000, scoped, tag = 'input window, operand 0, single buffered']
    #allocation4 [shape = 's32[1]{0}', space=sflag, size = 0x4, scoped, tag = 'scoped memory for tpu_custom_call.1']
    #allocation5 [shape = 's32[1]{0}', space=sflag, size = 0x4, scoped, tag = 'scoped memory for tpu_custom_call.1']
    #allocation6 [shape = 'u8[98304]{0}', space=vmem, size = 0x18000, scoped, tag = 'input window, operand 1, single buffered']
    #allocation7 [shape = 's32[1]{0}', space=sflag, size = 0x4, scoped, tag = 'scoped memory for tpu_custom_call.1']
    #allocation8 [shape = 'u8[131072]{0}', space=vmem, size = 0x20000, scoped, tag = 'input window, operand 3, single buffered']
    #allocation9 [shape = 'u8[65536]{0}', space=vmem, size = 0x10000, scoped, tag = 'output window, operand 0, single buffered']
    %10 = vsyncpa [#allocation4], 0
    %11 = vsyncpa [#allocation7], 0
    %12 = vsyncpa [#allocation5], 0
    // Predicated region
    $region2: #{tpu_custom_call.1} parent=1 // pred_check
      _
    $region3: #{tpu_custom_call.1} parent=1 // pred_check_branch
      %14 = sbr.rel (0) target = $region5
    $region4: #{tpu_custom_call.1} parent=1 // pred_region
      %s16 = ssub.s32 384, 384
      %17 = vsyncadd [#allocation4], %s16
      %s19 = sshll.u32 [#allocation3], 4
      %s20 = int_to_ptr.vmem [resolvable:$true] %s19
      %22 = dma.hbm_to_vmem [thread:$0]  %s0, 384, %s20, [#allocation4]
    $region5: #{tpu_custom_call.1} parent=1 // pred_fallthru
      _
    // Predicated region
    $region6: #{tpu_custom_call.1} parent=1 // pred_check
      _
    $region7: #{tpu_custom_call.1} parent=1 // pred_check_branch
      %24 = sbr.rel (0) target = $region9
    $region8: #{tpu_custom_call.1} parent=1 // pred_region
      %s26 = ssub.s32 3072, 3072
      %27 = vsyncadd [#allocation7], %s26
      %s28 = sshll.u32 [#allocation6], 4
      %s29 = int_to_ptr.vmem [resolvable:$true] %s28
      %34 = dma.hbm_to_vmem [thread:$0]  %s1, 3072, %s29, [#allocation7], 64, 64, 4
    $region9: #{tpu_custom_call.1} parent=1 // pred_fallthru
      _
    // Predicated region
    $region10: #{tpu_custom_call.1} parent=1 // pred_check
      _
    $region11: #{tpu_custom_call.1} parent=1 // pred_check_branch
      %36 = sbr.rel (0) target = $region13
    $region12: #{tpu_custom_call.1} parent=1 // pred_region
      _
    $region13: #{tpu_custom_call.1} parent=1 // pred_fallthru
      _
    // Predicated region
    $region14: #{tpu_custom_call.1} parent=1 // pred_check
      _
    $region15: #{tpu_custom_call.1} parent=1 // pred_check_branch
      %38 = sbr.rel (0) target = $region17
    $region16: #{tpu_custom_call.1} parent=1 // pred_region
      %s40 = ssub.s32 4096, 4096
      %41 = vsyncadd [#allocation7], %s40
      %s42 = sshll.u32 [#allocation8], 4
      %s43 = int_to_ptr.vmem [resolvable:$true] %s42
      %48 = dma.hbm_to_vmem [thread:$0]  %s3, 4096, %s43, [#allocation7], 256, 256, 16
    $region17: #{tpu_custom_call.1} parent=1 // pred_fallthru
      _
    // Predicated region
    $region18: #{tpu_custom_call.1} parent=1 // pred_check
      _
    $region19: #{tpu_custom_call.1} parent=1 // pred_check_branch
      %50 = sbr.rel (0) target = $region21
    $region20: #{tpu_custom_call.1} parent=1 // pred_region
      _
    $region21: #{tpu_custom_call.1} parent=1 // pred_fallthru
      _
    // Predicated region
    $region22: #{tpu_custom_call.1} parent=1 // pred_check
      _
    $region23: #{tpu_custom_call.1} parent=1 // pred_check_branch
      %52 = sbr.rel (0) target = $region25
    $region24: #{tpu_custom_call.1} parent=1 // pred_region
      %53 = dma.done [#allocation4], 384
    $region25: #{tpu_custom_call.1} parent=1 // pred_fallthru
      _
    // Predicated region
    $region26: #{tpu_custom_call.1} parent=1 // pred_check
      _
    $region27: #{tpu_custom_call.1} parent=1 // pred_check_branch
      %55 = sbr.rel (0) target = $region29
    $region28: #{tpu_custom_call.1} parent=1 // pred_region
      %56 = dma.done [#allocation7], 3072
    $region29: #{tpu_custom_call.1} parent=1 // pred_fallthru
      _
    // Predicated region
    $region30: #{tpu_custom_call.1} parent=1 // pred_check
      _
    $region31: #{tpu_custom_call.1} parent=1 // pred_check_branch
      %58 = sbr.rel (0) target = $region33
    $region32: #{tpu_custom_call.1} parent=1 // pred_region
      %59 = dma.done [#allocation7], 4096
    $region33: #{tpu_custom_call.1} parent=1 // pred_fallthru
      _
    %p61 = scmp.eq.s32.totalorder 0, 0
    // Predicated region
    $region34: #{tpu_custom_call.1} parent=1 // pred_check
      %p62 = pneg %p61
    $region35: #{tpu_custom_call.1} parent=1 // pred_check_branch
      %64 = sbr.rel (%p62) target = $region37
    $region36: #{tpu_custom_call.1} parent=1 // pred_region
      %65 = vst [vmem:[#allocation2] sm:$0xff] 0.0
      %66 = vst [vmem:[#allocation2 + $0x8] sm:$0xff] 0.0
      %67 = vst [vmem:[#allocation2 + $0x10] sm:$0xff] 0.0
      %68 = vst [vmem:[#allocation2 + $0x18] sm:$0xff] 0.0
    $region37: #{tpu_custom_call.1} parent=1 // pred_fallthru
      _
    %v69 = vld [vmem:[#allocation3] sm:$0xff]
    %v70 = vld [vmem:[#allocation3 + $0x8] sm:$0xff]
    %v71 = vld [vmem:[#allocation3 + $0x10] sm:$0xff]
    %v72 = vunpack.c.l.u8.bf16 %v69
    %v73 = vunpack.c.l.u8.bf16 %v70
    %v74 = vunpack.c.l.u8.bf16 %v71
    %v75 = vunpack.c.h.u8.bf16 %v69
    %v76 = vunpack.c.h.u8.bf16 %v70
    %v77 = vunpack.c.h.u8.bf16 %v71
    %v78 = vld [vmem:[#allocation2] sm:$0xff]
    %v79 = vld [vmem:[#allocation2 + $0x8] sm:$0xff]
    %v80 = vld [vmem:[#allocation2 + $0x10] sm:$0xff]
    %v81 = vld [vmem:[#allocation2 + $0x18] sm:$0xff]
    %v82 = vld [vmem:[#allocation6] sm:$0xf]
    %v83 = vld [vmem:[#allocation6 + $0x4] sm:$0xf]
    %v84 = vld [vmem:[#allocation6 + $0x8] sm:$0xf]
    %v85 = vld [vmem:[#allocation6 + $0xc] sm:$0xf]
    %v86 = vld [vmem:[#allocation6 + $0x10] sm:$0xf]
    %v87 = vld [vmem:[#allocation6 + $0x14] sm:$0xf]
    %v88 = vld [vmem:[#allocation6 + $0x18] sm:$0xf]
    %v89 = vld [vmem:[#allocation6 + $0x1c] sm:$0xf]
    %v90 = vld [vmem:[#allocation6 + $0x20] sm:$0xf]
    %v91 = vld [vmem:[#allocation6 + $0x24] sm:$0xf]
    %v92 = vld [vmem:[#allocation6 + $0x28] sm:$0xf]
    %v93 = vld [vmem:[#allocation6 + $0x2c] sm:$0xf]
    %v94 = vld [vmem:[#allocation6 + $0x30] sm:$0xf]
    %v95 = vld [vmem:[#allocation6 + $0x34] sm:$0xf]
    %v96 = vld [vmem:[#allocation6 + $0x38] sm:$0xf]
    %v97 = vld [vmem:[#allocation6 + $0x3c] sm:$0xf]
    %v98 = vld [vmem:[#allocation6 + $0x40] sm:$0xf]
    %v99 = vld [vmem:[#allocation6 + $0x44] sm:$0xf]
    %v100 = vld [vmem:[#allocation6 + $0x48] sm:$0xf]
    %v101 = vld [vmem:[#allocation6 + $0x4c] sm:$0xf]
    %v102 = vld [vmem:[#allocation6 + $0x50] sm:$0xf]
    %v103 = vld [vmem:[#allocation6 + $0x54] sm:$0xf]
    %v104 = vld [vmem:[#allocation6 + $0x58] sm:$0xf]
    %v105 = vld [vmem:[#allocation6 + $0x5c] sm:$0xf]
    %v106 = vld [vmem:[#allocation6 + $0x60] sm:$0xf]
    %v107 = vld [vmem:[#allocation6 + $0x64] sm:$0xf]
    %v108 = vld [vmem:[#allocation6 + $0x68] sm:$0xf]
    %v109 = vld [vmem:[#allocation6 + $0x6c] sm:$0xf]
    %v110 = vld [vmem:[#allocation6 + $0x70] sm:$0xf]
    %v111 = vld [vmem:[#allocation6 + $0x74] sm:$0xf]
    %v112 = vld [vmem:[#allocation6 + $0x78] sm:$0xf]
    %v113 = vld [vmem:[#allocation6 + $0x7c] sm:$0xf]
    %v114 = vld [vmem:[#allocation6 + $0x80] sm:$0xf]
    %v115 = vld [vmem:[#allocation6 + $0x84] sm:$0xf]
    %v116 = vld [vmem:[#allocation6 + $0x88] sm:$0xf]
    %v117 = vld [vmem:[#allocation6 + $0x8c] sm:$0xf]
    %v118 = vld [vmem:[#allocation6 + $0x90] sm:$0xf]
    %v119 = vld [vmem:[#allocation6 + $0x94] sm:$0xf]
    %v120 = vld [vmem:[#allocation6 + $0x98] sm:$0xf]
    %v121 = vld [vmem:[#allocation6 + $0x9c] sm:$0xf]
    %v122 = vld [vmem:[#allocation6 + $0xa0] sm:$0xf]
    %v123 = vld [vmem:[#allocation6 + $0xa4] sm:$0xf]
    %v124 = vld [vmem:[#allocation6 + $0xa8] sm:$0xf]
    %v125 = vld [vmem:[#allocation6 + $0xac] sm:$0xf]
    %v126 = vld [vmem:[#allocation6 + $0xb0] sm:$0xf]
    %v127 = vld [vmem:[#allocation6 + $0xb4] sm:$0xf]
    %v128 = vld [vmem:[#allocation6 + $0xb8] sm:$0xf]
    %v129 = vld [vmem:[#allocation6 + $0xbc] sm:$0xf]
    %v178 = vunpack.c.l.b16 %v82
    %v179 = vunpack.c.l.b16 %v83
    %v180 = vunpack.c.l.b16 %v84
    %v181 = vunpack.c.l.b16 %v85
    %v182 = vunpack.c.l.b16 %v86
    %v183 = vunpack.c.l.b16 %v87
    %v184 = vunpack.c.l.b16 %v88
    %v185 = vunpack.c.l.b16 %v89
    %v186 = vunpack.c.l.b16 %v90
    %v187 = vunpack.c.l.b16 %v91
    %v188 = vunpack.c.l.b16 %v92
    %v189 = vunpack.c.l.b16 %v93
    %v190 = vunpack.c.l.b16 %v94
    %v191 = vunpack.c.l.b16 %v95
    %v192 = vunpack.c.l.b16 %v96
    %v193 = vunpack.c.l.b16 %v97
    %v194 = vunpack.c.l.b16 %v98
    %v195 = vunpack.c.l.b16 %v99
    %v196 = vunpack.c.l.b16 %v100
    %v197 = vunpack.c.l.b16 %v101
    %v198 = vunpack.c.l.b16 %v102
    %v199 = vunpack.c.l.b16 %v103
    %v200 = vunpack.c.l.b16 %v104
    %v201 = vunpack.c.l.b16 %v105
    %v202 = vunpack.c.l.b16 %v106
    %v203 = vunpack.c.l.b16 %v107
    %v204 = vunpack.c.l.b16 %v108
    %v205 = vunpack.c.l.b16 %v109
    %v206 = vunpack.c.l.b16 %v110
    %v207 = vunpack.c.l.b16 %v111
    %v208 = vunpack.c.l.b16 %v112
    %v209 = vunpack.c.l.b16 %v113
    %v210 = vunpack.c.l.b16 %v114
    %v211 = vunpack.c.l.b16 %v115
    %v212 = vunpack.c.l.b16 %v116
    %v213 = vunpack.c.l.b16 %v117
    %v214 = vunpack.c.l.b16 %v118
    %v215 = vunpack.c.l.b16 %v119
    %v216 = vunpack.c.l.b16 %v120
    %v217 = vunpack.c.l.b16 %v121
    %v218 = vunpack.c.l.b16 %v122
    %v219 = vunpack.c.l.b16 %v123
    %v220 = vunpack.c.l.b16 %v124
    %v221 = vunpack.c.l.b16 %v125
    %v222 = vunpack.c.l.b16 %v126
    %v223 = vunpack.c.l.b16 %v127
    %v224 = vunpack.c.l.b16 %v128
    %v225 = vunpack.c.l.b16 %v129
    %v226 = vpack.c.b16 %v179, %v178
    %v227 = vpack.c.b16 %v181, %v180
    %v228 = vpack.c.b16 %v183, %v182
    %v229 = vpack.c.b16 %v185, %v184
    %v230 = vpack.c.b16 %v187, %v186
    %v231 = vpack.c.b16 %v189, %v188
    %v232 = vpack.c.b16 %v191, %v190
    %v233 = vpack.c.b16 %v193, %v192
    %v234 = vpack.c.b16 %v195, %v194
    %v235 = vpack.c.b16 %v197, %v196
    %v236 = vpack.c.b16 %v199, %v198
    %v237 = vpack.c.b16 %v201, %v200
    %v238 = vpack.c.b16 %v203, %v202
    %v239 = vpack.c.b16 %v205, %v204
    %v240 = vpack.c.b16 %v207, %v206
    %v241 = vpack.c.b16 %v209, %v208
    %v242 = vpack.c.b16 %v211, %v210
    %v243 = vpack.c.b16 %v213, %v212
    %v244 = vpack.c.b16 %v215, %v214
    %v245 = vpack.c.b16 %v217, %v216
    %v246 = vpack.c.b16 %v219, %v218
    %v247 = vpack.c.b16 %v221, %v220
    %v248 = vpack.c.b16 %v223, %v222
    %v249 = vpack.c.b16 %v225, %v224
    %274 = vmatprep.subr.bf16.mxu0 0
    %275 = vmatpush1.bf16.msra.mxu0 %v226
    %276 = vmatprep.subr.bf16.mxu0 0
    %277 = vmatpush1.bf16.msra.mxu0 %v227
    %278 = vmatprep.subr.bf16.mxu0 0
    %279 = vmatpush1.bf16.msra.mxu0 %v228
    %280 = vmatprep.subr.bf16.mxu0 0
    %281 = vmatpush1.bf16.msra.mxu0 %v229
    %282 = vmatprep.subr.bf16.mxu0 0
    %283 = vmatpush1.bf16.msra.mxu0 %v230
    %284 = vmatprep.subr.bf16.mxu0 0
    %285 = vmatpush1.bf16.msra.mxu0 %v231
    %286 = vmatprep.subr.bf16.mxu0 0
    %287 = vmatpush1.bf16.msra.mxu0 %v232
    %288 = vmatprep.subr.bf16.mxu0 0
    %289 = vmatpush1.bf16.msra.mxu0 %v233
    %290 = vmatprep.subr.bf16.mxu0 0
    %291 = vmatpush1.bf16.msra.mxu0 %v234
    %292 = vmatprep.subr.bf16.mxu0 0
    %293 = vmatpush1.bf16.msra.mxu0 %v235
    %294 = vmatprep.subr.bf16.mxu0 0
    %295 = vmatpush1.bf16.msra.mxu0 %v236
    %296 = vmatprep.subr.bf16.mxu0 0
    %297 = vmatpush1.bf16.msra.mxu0 %v237
    %298 = vmatprep.subr.bf16.mxu0 0
    %299 = vmatpush1.bf16.msra.mxu0 %v238
    %300 = vmatprep.subr.bf16.mxu0 0
    %301 = vmatpush1.bf16.msra.mxu0 %v239
    %302 = vmatprep.subr.bf16.mxu0 0
    %303 = vmatpush1.bf16.msra.mxu0 %v240
    %304 = vmatprep.subr.bf16.mxu0 0
    %305 = vmatpush1.bf16.msra.mxu0 %v241
    %306 = vmatprep.mubr.bf16.mxu0 %v73
    %307 = vmatmul.mubr.bf16.gmra.mrb[0].mxu0 %v72
    %v308 = vpop.f32.mrb[0].mxu0
    %v309 = vadd.f32 0.0, %v308
    %v310 = vpop.f32.mrb[0].mxu0
    %v311 = vpop.f32.mrb[0].mxu0
    %v312 = vadd.f32 0.0, %v311
    %v313 = vpop.f32.mrb[0].mxu0
    %314 = vmatprep.mubr.bf16.mxu0 %v76
    %315 = vmatmul.mubr.bf16.gmra.mrb[0].mxu0 %v75
    %v316 = vpop.f32.mrb[0].mxu0
    %v317 = vadd.f32 0.0, %v316
    %v318 = vpop.f32.mrb[0].mxu0
    %v319 = vpop.f32.mrb[0].mxu0
    %v320 = vadd.f32 0.0, %v319
    %v321 = vpop.f32.mrb[0].mxu0
    %322 = vdwg.mxu0
    %323 = vmatprep.subr.bf16.mxu0 0
    %324 = vmatpush1.bf16.msra.mxu0 %v242
    %325 = vmatprep.subr.bf16.mxu0 0
    %326 = vmatpush1.bf16.msra.mxu0 %v243
    %327 = vmatprep.subr.bf16.mxu0 0
    %328 = vmatpush1.bf16.msra.mxu0 %v244
    %329 = vmatprep.subr.bf16.mxu0 0
    %330 = vmatpush1.bf16.msra.mxu0 %v245
    %331 = vmatprep.subr.bf16.mxu0 0
    %332 = vmatpush1.bf16.msra.mxu0 %v246
    %333 = vmatprep.subr.bf16.mxu0 0
    %334 = vmatpush1.bf16.msra.mxu0 %v247
    %335 = vmatprep.subr.bf16.mxu0 0
    %336 = vmatpush1.bf16.msra.mxu0 %v248
    %337 = vmatprep.subr.bf16.mxu0 0
    %338 = vmatpush1.bf16.msra.mxu0 %v249
    %339 = vmatprep.subr.bf16.mxu0 0
    %340 = vmatpush1.bf16.msra.mxu0 0
    %341 = vmatprep.subr.bf16.mxu0 0
    %342 = vmatpush1.bf16.msra.mxu0 0
    %343 = vmatprep.subr.bf16.mxu0 0
    %344 = vmatpush1.bf16.msra.mxu0 0
    %345 = vmatprep.subr.bf16.mxu0 0
    %346 = vmatpush1.bf16.msra.mxu0 0
    %347 = vmatprep.subr.bf16.mxu0 0
    %348 = vmatpush1.bf16.msra.mxu0 0
    %349 = vmatprep.subr.bf16.mxu0 0
    %350 = vmatpush1.bf16.msra.mxu0 0
    %351 = vmatprep.subr.bf16.mxu0 0
    %352 = vmatpush1.bf16.msra.mxu0 0
    %353 = vmatprep.subr.bf16.mxu0 0
    %354 = vmatpush1.bf16.msra.mxu0 0
    %355 = vmatprep.mubr.bf16.mxu0 0
    %356 = vmatmul.mubr.bf16.gmra.mrb[0].mxu0 %v74
    %v357 = vpop.f32.mrb[0].mxu0
    %v358 = vadd.f32 %v309, %v357
    %v359 = vpop.f32.mrb[0].mxu0
    %v360 = vpop.f32.mrb[0].mxu0
    %v361 = vadd.f32 %v312, %v360
    %v362 = vpop.f32.mrb[0].mxu0
    %363 = vmatprep.mubr.bf16.mxu0 0
    %364 = vmatmul.mubr.bf16.gmra.mrb[0].mxu0 %v77
    %v365 = vpop.f32.mrb[0].mxu0
    %v366 = vadd.f32 %v317, %v365
    %v367 = vpop.f32.mrb[0].mxu0
    %v368 = vpop.f32.mrb[0].mxu0
    %v369 = vadd.f32 %v320, %v368
    %v370 = vpop.f32.mrb[0].mxu0
    %371 = vdwg.mxu0
    %v372 = vadd.f32 %v78, %v358
    %v373 = vadd.f32 %v79, %v361
    %v374 = vadd.f32 %v80, %v366
    %v375 = vadd.f32 %v81, %v369
    %376 = vst [vmem:[#allocation2] sm:$0xff] %v372
    %377 = vst [vmem:[#allocation2 + $0x8] sm:$0xff] %v373
    %378 = vst [vmem:[#allocation2 + $0x10] sm:$0xff] %v374
    %379 = vst [vmem:[#allocation2 + $0x18] sm:$0xff] %v375
    // Predicated region
    $region38: #{tpu_custom_call.1} parent=1 // pred_check
      %p380 = pneg %p61
    $region39: #{tpu_custom_call.1} parent=1 // pred_check_branch
      %382 = sbr.rel (%p380) target = $region41
    $region40: #{tpu_custom_call.1} parent=1 // pred_region
      %v383 = vld [vmem:[#allocation2] sm:$0xff]
      %v384 = vld [vmem:[#allocation2 + $0x8] sm:$0xff]
      %v385 = vld [vmem:[#allocation2 + $0x10] sm:$0xff]
      %v386 = vld [vmem:[#allocation2 + $0x18] sm:$0xff]
      %v387 = vld [vmem:[%s2] sm:$0x1]
      %v389 = vlaneseq
      %v390 = vshrl.u32 %v389, 7
      %v391 = vsub.s32 0, %v390
      %v392 = vrot.slane %v387, %v391
      %v394 = vadd.f32 %v383, %v392
      %v395 = vadd.f32 %v384, %v392
      %v396 = vadd.f32 %v385, %v392
      %v397 = vadd.f32 %v386, %v392
      %v398 = vmax.f32 %v394, 0.0
      %v399 = vmax.f32 %v395, 0.0
      %v400 = vmax.f32 %v396, 0.0
      %v401 = vmax.f32 %v397, 0.0
      %v402 = vpack.c.bf16 %v399, %v398
      %v403 = vpack.c.bf16 %v401, %v400
      %v404 = vld [vmem:[#allocation8] sm:$0xff]
      %v405 = vld [vmem:[#allocation8 + $0x8] sm:$0xff]
      %v406 = vld [vmem:[#allocation8 + $0x10] sm:$0xff]
      %v407 = vld [vmem:[#allocation8 + $0x18] sm:$0xff]
      %v408 = vld [vmem:[#allocation8 + $0x20] sm:$0xff]
      %v409 = vld [vmem:[#allocation8 + $0x28] sm:$0xff]
      %v410 = vld [vmem:[#allocation8 + $0x30] sm:$0xff]
      %v411 = vld [vmem:[#allocation8 + $0x38] sm:$0xff]
      %v412 = vld [vmem:[#allocation8 + $0x40] sm:$0xff]
      %v413 = vld [vmem:[#allocation8 + $0x48] sm:$0xff]
      %v414 = vld [vmem:[#allocation8 + $0x50] sm:$0xff]
      %v415 = vld [vmem:[#allocation8 + $0x58] sm:$0xff]
      %v416 = vld [vmem:[#allocation8 + $0x60] sm:$0xff]
      %v417 = vld [vmem:[#allocation8 + $0x68] sm:$0xff]
      %v418 = vld [vmem:[#allocation8 + $0x70] sm:$0xff]
      %v419 = vld [vmem:[#allocation8 + $0x78] sm:$0xff]
      %v420 = vld [vmem:[#allocation8 + $0x80] sm:$0xff]
      %v421 = vld [vmem:[#allocation8 + $0x88] sm:$0xff]
      %v422 = vld [vmem:[#allocation8 + $0x90] sm:$0xff]
      %v423 = vld [vmem:[#allocation8 + $0x98] sm:$0xff]
      %v424 = vld [vmem:[#allocation8 + $0xa0] sm:$0xff]
      %v425 = vld [vmem:[#allocation8 + $0xa8] sm:$0xff]
      %v426 = vld [vmem:[#allocation8 + $0xb0] sm:$0xff]
      %v427 = vld [vmem:[#allocation8 + $0xb8] sm:$0xff]
      %v428 = vld [vmem:[#allocation8 + $0xc0] sm:$0xff]
      %v429 = vld [vmem:[#allocation8 + $0xc8] sm:$0xff]
      %v430 = vld [vmem:[#allocation8 + $0xd0] sm:$0xff]
      %v431 = vld [vmem:[#allocation8 + $0xd8] sm:$0xff]
      %v432 = vld [vmem:[#allocation8 + $0xe0] sm:$0xff]
      %v433 = vld [vmem:[#allocation8 + $0xe8] sm:$0xff]
      %v434 = vld [vmem:[#allocation8 + $0xf0] sm:$0xff]
      %v435 = vld [vmem:[#allocation8 + $0xf8] sm:$0xff]
      %v436 = vld [vmem:[%s4] sm:$0xf]
      %v438 = vlaneseq
      %v439 = vshrl.u32 %v438, 7
      %v440 = vsub.s32 0, %v439
      %v441 = vrot.slane %v436, %v440
      %v442 = vlaneseq
      %v443 = vshrl.u32 %v442, 7
      %v444 = vsub.s32 1, %v443
      %v445 = vrot.slane %v436, %v444
      %v446 = vlaneseq
      %v447 = vshrl.u32 %v446, 7
      %v448 = vsub.s32 2, %v447
      %v449 = vrot.slane %v436, %v448
      %v450 = vlaneseq
      %v451 = vshrl.u32 %v450, 7
      %v452 = vsub.s32 3, %v451
      %v453 = vrot.slane %v436, %v452
      %v490 = vunpack.c.l.b16 %v404
      %v491 = vunpack.c.h.b16 %v404
      %v492 = vunpack.c.l.b16 %v405
      %v493 = vunpack.c.h.b16 %v405
      %v494 = vunpack.c.l.b16 %v406
      %v495 = vunpack.c.h.b16 %v406
      %v496 = vunpack.c.l.b16 %v407
      %v497 = vunpack.c.h.b16 %v407
      %v498 = vunpack.c.l.b16 %v408
      %v499 = vunpack.c.h.b16 %v408
      %v500 = vunpack.c.l.b16 %v409
      %v501 = vunpack.c.h.b16 %v409
      %v502 = vunpack.c.l.b16 %v410
      %v503 = vunpack.c.h.b16 %v410
      %v504 = vunpack.c.l.b16 %v411
      %v505 = vunpack.c.h.b16 %v411
      %v506 = vunpack.c.l.b16 %v412
      %v507 = vunpack.c.h.b16 %v412
      %v508 = vunpack.c.l.b16 %v413
      %v509 = vunpack.c.h.b16 %v413
      %v510 = vunpack.c.l.b16 %v414
      %v511 = vunpack.c.h.b16 %v414
      %v512 = vunpack.c.l.b16 %v415
      %v513 = vunpack.c.h.b16 %v415
      %v514 = vunpack.c.l.b16 %v416
      %v515 = vunpack.c.h.b16 %v416
      %v516 = vunpack.c.l.b16 %v417
      %v517 = vunpack.c.h.b16 %v417
      %v518 = vunpack.c.l.b16 %v418
      %v519 = vunpack.c.h.b16 %v418
      %v520 = vunpack.c.l.b16 %v419
      %v521 = vunpack.c.h.b16 %v419
      %v522 = vunpack.c.l.b16 %v420
      %v523 = vunpack.c.h.b16 %v420
      %v524 = vunpack.c.l.b16 %v421
      %v525 = vunpack.c.h.b16 %v421
      %v526 = vunpack.c.l.b16 %v422
      %v527 = vunpack.c.h.b16 %v422
      %v528 = vunpack.c.l.b16 %v423
      %v529 = vunpack.c.h.b16 %v423
      %v530 = vunpack.c.l.b16 %v424
      %v531 = vunpack.c.h.b16 %v424
      %v532 = vunpack.c.l.b16 %v425
      %v533 = vunpack.c.h.b16 %v425
      %v534 = vunpack.c.l.b16 %v426
      %v535 = vunpack.c.h.b16 %v426
      %v536 = vunpack.c.l.b16 %v427
      %v537 = vunpack.c.h.b16 %v427
      %v538 = vunpack.c.l.b16 %v428
      %v539 = vunpack.c.h.b16 %v428
      %v540 = vunpack.c.l.b16 %v429
      %v541 = vunpack.c.h.b16 %v429
      %v542 = vunpack.c.l.b16 %v430
      %v543 = vunpack.c.h.b16 %v430
      %v544 = vunpack.c.l.b16 %v431
      %v545 = vunpack.c.h.b16 %v431
      %v546 = vunpack.c.l.b16 %v432
      %v547 = vunpack.c.h.b16 %v432
      %v548 = vunpack.c.l.b16 %v433
      %v549 = vunpack.c.h.b16 %v433
      %v550 = vunpack.c.l.b16 %v434
      %v551 = vunpack.c.h.b16 %v434
      %v552 = vunpack.c.l.b16 %v435
      %v553 = vunpack.c.h.b16 %v435
      %v554 = vpack.c.b16 %v494, %v490
      %v555 = vpack.c.b16 %v495, %v491
      %v556 = vpack.c.b16 %v496, %v492
      %v557 = vpack.c.b16 %v497, %v493
      %v558 = vpack.c.b16 %v502, %v498
      %v559 = vpack.c.b16 %v503, %v499
      %v560 = vpack.c.b16 %v504, %v500
      %v561 = vpack.c.b16 %v505, %v501
      %v562 = vpack.c.b16 %v510, %v506
      %v563 = vpack.c.b16 %v511, %v507
      %v564 = vpack.c.b16 %v512, %v508
      %v565 = vpack.c.b16 %v513, %v509
      %v566 = vpack.c.b16 %v518, %v514
      %v567 = vpack.c.b16 %v519, %v515
      %v568 = vpack.c.b16 %v520, %v516
      %v569 = vpack.c.b16 %v521, %v517
      %v570 = vpack.c.b16 %v526, %v522
      %v571 = vpack.c.b16 %v527, %v523
      %v572 = vpack.c.b16 %v528, %v524
      %v573 = vpack.c.b16 %v529, %v525
      %v574 = vpack.c.b16 %v534, %v530
      %v575 = vpack.c.b16 %v535, %v531
      %v576 = vpack.c.b16 %v536, %v532
      %v577 = vpack.c.b16 %v537, %v533
      %v578 = vpack.c.b16 %v542, %v538
      %v579 = vpack.c.b16 %v543, %v539
      %v580 = vpack.c.b16 %v544, %v540
      %v581 = vpack.c.b16 %v545, %v541
      %v582 = vpack.c.b16 %v550, %v546
      %v583 = vpack.c.b16 %v551, %v547
      %v584 = vpack.c.b16 %v552, %v548
      %v585 = vpack.c.b16 %v553, %v549
      %618 = vmatprep.subr.bf16.mxu0 %v555
      %619 = vmatpush1.bf16.msra.mxu0 %v554
      %620 = vmatprep.subr.bf16.mxu0 %v559
      %621 = vmatpush1.bf16.msra.mxu0 %v558
      %622 = vmatprep.subr.bf16.mxu0 %v563
      %623 = vmatpush1.bf16.msra.mxu0 %v562
      %624 = vmatprep.subr.bf16.mxu0 %v567
      %625 = vmatpush1.bf16.msra.mxu0 %v566
      %626 = vmatprep.subr.bf16.mxu0 %v571
      %627 = vmatpush1.bf16.msra.mxu0 %v570
      %628 = vmatprep.subr.bf16.mxu0 %v575
      %629 = vmatpush1.bf16.msra.mxu0 %v574
      %630 = vmatprep.subr.bf16.mxu0 %v579
      %631 = vmatpush1.bf16.msra.mxu0 %v578
      %632 = vmatprep.subr.bf16.mxu0 %v583
      %633 = vmatpush1.bf16.msra.mxu0 %v582
      %634 = vmatprep.subr.bf16.mxu0 0
      %635 = vmatpush1.bf16.msra.mxu0 0
      %636 = vmatprep.subr.bf16.mxu0 0
      %637 = vmatpush1.bf16.msra.mxu0 0
      %638 = vmatprep.subr.bf16.mxu0 0
      %639 = vmatpush1.bf16.msra.mxu0 0
      %640 = vmatprep.subr.bf16.mxu0 0
      %641 = vmatpush1.bf16.msra.mxu0 0
      %642 = vmatprep.subr.bf16.mxu0 0
      %643 = vmatpush1.bf16.msra.mxu0 0
      %644 = vmatprep.subr.bf16.mxu0 0
      %645 = vmatpush1.bf16.msra.mxu0 0
      %646 = vmatprep.subr.bf16.mxu0 0
      %647 = vmatpush1.bf16.msra.mxu0 0
      %648 = vmatprep.subr.bf16.mxu0 0
      %649 = vmatpush1.bf16.msra.mxu0 0
      %650 = vmatprep.mubr.bf16.mxu0 0
      %651 = vmatmul.mubr.bf16.gmra.mrb[0].mxu0 %v402
      %v652 = vpop.f32.mrb[0].mxu0
      %v653 = vadd.f32 %v441, %v652
      %v654 = vpop.f32.mrb[0].mxu0
      %v655 = vadd.f32 %v445, %v654
      %v656 = vpop.f32.mrb[0].mxu0
      %v657 = vadd.f32 %v441, %v656
      %v658 = vpop.f32.mrb[0].mxu0
      %v659 = vadd.f32 %v445, %v658
      %660 = vmatprep.mubr.bf16.mxu0 0
      %661 = vmatmul.mubr.bf16.gmra.mrb[0].mxu0 %v403
      %v662 = vpop.f32.mrb[0].mxu0
      %v663 = vadd.f32 %v441, %v662
      %v664 = vpop.f32.mrb[0].mxu0
      %v665 = vadd.f32 %v445, %v664
      %v666 = vpop.f32.mrb[0].mxu0
      %v667 = vadd.f32 %v441, %v666
      %v668 = vpop.f32.mrb[0].mxu0
      %v669 = vadd.f32 %v445, %v668
      %670 = vdwg.mxu0
      %671 = vmatprep.subr.bf16.mxu0 %v557
      %672 = vmatpush1.bf16.msra.mxu0 %v556
      %673 = vmatprep.subr.bf16.mxu0 %v561
      %674 = vmatpush1.bf16.msra.mxu0 %v560
      %675 = vmatprep.subr.bf16.mxu0 %v565
      %676 = vmatpush1.bf16.msra.mxu0 %v564
      %677 = vmatprep.subr.bf16.mxu0 %v569
      %678 = vmatpush1.bf16.msra.mxu0 %v568
      %679 = vmatprep.subr.bf16.mxu0 %v573
      %680 = vmatpush1.bf16.msra.mxu0 %v572
      %681 = vmatprep.subr.bf16.mxu0 %v577
      %682 = vmatpush1.bf16.msra.mxu0 %v576
      %683 = vmatprep.subr.bf16.mxu0 %v581
      %684 = vmatpush1.bf16.msra.mxu0 %v580
      %685 = vmatprep.subr.bf16.mxu0 %v585
      %686 = vmatpush1.bf16.msra.mxu0 %v584
      %687 = vmatprep.subr.bf16.mxu0 0
      %688 = vmatpush1.bf16.msra.mxu0 0
      %689 = vmatprep.subr.bf16.mxu0 0
      %690 = vmatpush1.bf16.msra.mxu0 0
      %691 = vmatprep.subr.bf16.mxu0 0
      %692 = vmatpush1.bf16.msra.mxu0 0
      %693 = vmatprep.subr.bf16.mxu0 0
      %694 = vmatpush1.bf16.msra.mxu0 0
      %695 = vmatprep.subr.bf16.mxu0 0
      %696 = vmatpush1.bf16.msra.mxu0 0
      %697 = vmatprep.subr.bf16.mxu0 0
      %698 = vmatpush1.bf16.msra.mxu0 0
      %699 = vmatprep.subr.bf16.mxu0 0
      %700 = vmatpush1.bf16.msra.mxu0 0
      %701 = vmatprep.subr.bf16.mxu0 0
      %702 = vmatpush1.bf16.msra.mxu0 0
      %703 = vmatprep.mubr.bf16.mxu0 0
      %704 = vmatmul.mubr.bf16.gmra.mrb[0].mxu0 %v402
      %v705 = vpop.f32.mrb[0].mxu0
      %v706 = vadd.f32 %v449, %v705
      %v707 = vpop.f32.mrb[0].mxu0
      %v708 = vadd.f32 %v453, %v707
      %v709 = vpop.f32.mrb[0].mxu0
      %v710 = vadd.f32 %v449, %v709
      %v711 = vpop.f32.mrb[0].mxu0
      %v712 = vadd.f32 %v453, %v711
      %713 = vmatprep.mubr.bf16.mxu0 0
      %714 = vmatmul.mubr.bf16.gmra.mrb[0].mxu0 %v403
      %v715 = vpop.f32.mrb[0].mxu0
      %v716 = vadd.f32 %v449, %v715
      %v717 = vpop.f32.mrb[0].mxu0
      %v718 = vadd.f32 %v453, %v717
      %v719 = vpop.f32.mrb[0].mxu0
      %v720 = vadd.f32 %v449, %v719
      %v721 = vpop.f32.mrb[0].mxu0
      %v722 = vadd.f32 %v453, %v721
      %723 = vdwg.mxu0
      %724 = vst [vmem:[#allocation9] sm:$0xff] %v653
      %725 = vst [vmem:[#allocation9 + $0x8] sm:$0xff] %v655
      %726 = vst [vmem:[#allocation9 + $0x10] sm:$0xff] %v706
      %727 = vst [vmem:[#allocation9 + $0x18] sm:$0xff] %v708
      %728 = vst [vmem:[#allocation9 + $0x20] sm:$0xff] %v657
      %729 = vst [vmem:[#allocation9 + $0x28] sm:$0xff] %v659
      %730 = vst [vmem:[#allocation9 + $0x30] sm:$0xff] %v710
      %731 = vst [vmem:[#allocation9 + $0x38] sm:$0xff] %v712
      %732 = vst [vmem:[#allocation9 + $0x40] sm:$0xff] %v663
      %733 = vst [vmem:[#allocation9 + $0x48] sm:$0xff] %v665
      %734 = vst [vmem:[#allocation9 + $0x50] sm:$0xff] %v716
      %735 = vst [vmem:[#allocation9 + $0x58] sm:$0xff] %v718
      %736 = vst [vmem:[#allocation9 + $0x60] sm:$0xff] %v667
      %737 = vst [vmem:[#allocation9 + $0x68] sm:$0xff] %v669
      %738 = vst [vmem:[#allocation9 + $0x70] sm:$0xff] %v720
      %739 = vst [vmem:[#allocation9 + $0x78] sm:$0xff] %v722
    $region41: #{tpu_custom_call.1} parent=1 // pred_fallthru
      _
    // Predicated region
    $region42: #{tpu_custom_call.1} parent=1 // pred_check
      _
    $region43: #{tpu_custom_call.1} parent=1 // pred_check_branch
      %741 = sbr.rel (0) target = $region45
    $region44: #{tpu_custom_call.1} parent=1 // pred_region
      %s743 = ssub.s32 2048, 2048
      %744 = vsyncadd [#allocation5], %s743
      %s745 = sshll.u32 [#allocation9], 4
      %s746 = int_to_ptr.vmem [resolvable:$true] %s745
      %751 = dma.vmem_to_hbm [thread:$0]  %s746, 2048, %s5, [#allocation5], 512, 512, 32
    $region45: #{tpu_custom_call.1} parent=1 // pred_fallthru
      _
    // Predicated region
    $region46: #{tpu_custom_call.1} parent=1 // pred_check
      _
    $region47: #{tpu_custom_call.1} parent=1 // pred_check_branch
      %753 = sbr.rel (0) target = $region49
    $region48: #{tpu_custom_call.1} parent=1 // pred_region
      %754 = dma.done [#allocation5], 2048
    $region49: #{tpu_custom_call.1} parent=1 // pred_fallthru
      _
    %755 = vsyncpa [#allocation4], 1
    %756 = vsyncpa [#allocation7], 1
    %757 = vsyncpa [#allocation5], 1

</llo_original>
